<compile_context>
chip_gen: v7x
topology: tpu7x:2x2x1
jax: 0.10.0
libtpu: 0.0.40
codegen_flags: <defaults>
</compile_context>

<pallas_src>
import jax
import jax.numpy as jnp
from jax.experimental import pallas as pl
from jax.experimental.pallas import tpu as pltpu

_LANE = 128
_SUBLANE_ALIGN = 32      # lcm of sublane packing for 8-, 16- and 32-bit dtypes
_INV_128 = 0.0078125     # exactly 1/128


def _transform_kernel(x_ref, o_ref):
    # Cast-in / cast-out live here so HBM traffic stays in the narrow
    # source / destination dtypes.
    x = x_ref[...].astype(jnp.float32)
    o_ref[...] = ((x - 127.0) * _INV_128).astype(o_ref.dtype)


def _round_up(n: int, m: int) -> int:
    return ((n + m - 1) // m) * m


def _round_down_min(n: int, m: int) -> int:
    return max(m, (n // m) * m)


def _is_v7x() -> bool:
    try:
        kind = jax.devices()[0].device_kind.lower()
    except Exception:
        return False
    return ("v7" in kind) or ("7x" in kind)


def transform_input(x: jax.Array) -> jax.Array:
    """Pallas TPU implementation of TransformInput.forward: (x - 127.0) / 128.0."""
    orig_shape = x.shape
    # PyTorch promotes integer inputs to float32; float inputs keep their dtype.
    out_dtype = x.dtype if jnp.issubdtype(x.dtype, jnp.floating) else jnp.float32

    total = x.size
    if total == 0 or total % _LANE != 0:
        # TODO(synk): ragged totals (not a multiple of 128) use a single fused
        # XLA elementwise op (still one read + one write pass) instead of the
        # old pad/slice fallback that doubled HBM traffic.
        return ((x.astype(jnp.float32) - 127.0) * _INV_128).astype(out_dtype)

    rows = total // _LANE
    x2d = jnp.ravel(x).reshape(rows, _LANE)  # free, layout-preserving reshape

    in_b = jnp.dtype(x.dtype).itemsize
    out_b = jnp.dtype(out_dtype).itemsize
    row_bytes = _LANE * (in_b + out_b)

    is_v7x = _is_v7x()

    # Block sizing: target ~8 MiB of (in + out) bytes per block on v5e/v6e,
    # ~16 MiB on v7x (faster HBM, same ~0.35 us per-step overhead).  Row tiles
    # are multiples of 32 so the block is sublane-aligned for 8/16/32-bit
    # element types alike.  Double-buffered footprint stays <= 32 MiB, well
    # inside the explicit 48 MiB VMEM limit below.
    target_block_bytes = (16 << 20) if is_v7x else (8 << 20)
    max_tile_rows = _round_down_min(target_block_bytes // row_bytes, _SUBLANE_ALIGN)

    if rows <= max_tile_rows:
        if is_v7x and rows > 2 * _SUBLANE_ALIGN:
            # Split medium inputs into 2 blocks so both v7x TensorCores get work.
            tile_rows = _round_up(pl.cdiv(rows, 2), _SUBLANE_ALIGN)
        else:
            # Single-TC chips: one full-extent block, no pointless extra steps.
            tile_rows = rows
    else:
        tile_rows = max_tile_rows

    num_blocks = pl.cdiv(rows, tile_rows)
    if is_v7x and num_blocks > 2 and num_blocks % 2 == 1:
        # Even grid so the two TensorCores get the same number of blocks.
        tile_rows = _round_up(pl.cdiv(rows, num_blocks + 1), _SUBLANE_ALIGN)
        num_blocks = pl.cdiv(rows, tile_rows)
    grid = (num_blocks,)

    cost = pl.CostEstimate(
        flops=2 * total,
        transcendentals=0,
        bytes_accessed=total * (in_b + out_b),
    )

    def _call(dim_semantics):
        return pl.pallas_call(
            _transform_kernel,
            out_shape=jax.ShapeDtypeStruct((rows, _LANE), out_dtype),
            grid_spec=pltpu.PrefetchScalarGridSpec(
                num_scalar_prefetch=0,
                grid=grid,
                # TODO(synk): consider pipeline_mode=pl.Buffered(3) on the input
                # for uint8->f32 if the profile shows exposed read DMA.
                in_specs=[pl.BlockSpec((tile_rows, _LANE), lambda i: (i, 0))],
                out_specs=pl.BlockSpec((tile_rows, _LANE), lambda i: (i, 0)),
            ),
            compiler_params=pltpu.CompilerParams(
                dimension_semantics=dim_semantics,
                vmem_limit_bytes=48 * 1024 * 1024,
            ),
            cost_estimate=cost,
        )(x2d)

    if is_v7x and num_blocks > 1:
        try:
            # CORE_PARALLEL actually shards the grid axis across the 2 TCs.
            return _call((pltpu.CORE_PARALLEL,)).reshape(orig_shape)
        except Exception:
            pass  # fall back to plain parallel semantics if rejected
    return _call(("parallel",)).reshape(orig_shape)


if __name__ == "__main__":
    key = jax.random.PRNGKey(0)

    # Small NCHW input consistent with an SSD-style image tensor (float path).
    x_f32 = jax.random.uniform(key, (2, 4, 16, 16), dtype=jnp.float32) * 255.0
    out_f32 = jax.block_until_ready(transform_input(x_f32))
    ref_f32 = (x_f32 - 127.0) / 128.0
    assert out_f32.shape == x_f32.shape
    assert out_f32.dtype == ref_f32.dtype
    assert jnp.allclose(out_f32, ref_f32, atol=1e-6, rtol=1e-6)

    # uint8 path (the realistic preprocessing input) -> promoted to float32.
    x_u8 = (jax.random.uniform(key, (2, 4, 16, 16)) * 255.0).astype(jnp.uint8)
    out_u8 = jax.block_until_ready(transform_input(x_u8))
    ref_u8 = (x_u8.astype(jnp.float32) - 127.0) / 128.0
    assert out_u8.shape == x_u8.shape
    assert out_u8.dtype == jnp.float32
    assert jnp.allclose(out_u8, ref_u8, atol=1e-6, rtol=1e-6)

    print("KERNEL_OK")
</pallas_src>

<mosaic_0001>
module attributes {stable_mosaic.version = 11 : i64} {
  func.func @_transform_kernel(%arg0: i32, %arg1: memref<16x128xf32, #tpu.memory_space<vmem>>, %arg2: memref<16x128xf32, #tpu.memory_space<vmem>>) attributes {dimension_semantics = [#tpu.dimension_semantics<parallel>], iteration_bounds = array<i64: 1>, scalar_prefetch = 0 : i64, scratch_operands = 0 : i64, tpu.core_type = #tpu.core_type<tc>, window_params = [{transform_indices = @transform_0, window_bounds = array<i64: 16, 128>}, {transform_indices = @transform_1, window_bounds = array<i64: 16, 128>}]} {
    %c0 = arith.constant 0 : index
    %c0_0 = arith.constant 0 : index
    %0 = vector.load %arg1[%c0, %c0_0] : memref<16x128xf32, #tpu.memory_space<vmem>>, vector<16x128xf32>
    %cst = arith.constant 1.270000e+02 : f32
    %1 = vector.broadcast %cst : f32 to vector<16x128xf32>
    %2 = arith.subf %0, %1 : vector<16x128xf32>
    %cst_1 = arith.constant 7.812500e-03 : f32
    %3 = vector.broadcast %cst_1 : f32 to vector<16x128xf32>
    %4 = arith.mulf %2, %3 : vector<16x128xf32>
    %c0_2 = arith.constant 0 : index
    %c0_3 = arith.constant 0 : index
    %5 = vector.load %arg2[%c0_2, %c0_3] : memref<16x128xf32, #tpu.memory_space<vmem>>, vector<16x128xf32>
    tpu.vector_store %arg2[%c0_2, %c0_3], %4 {strides = array<i32>} : memref<16x128xf32, #tpu.memory_space<vmem>>, vector<16x128xf32>,
    return
  }
  func.func @transform_0(%arg0: i32) -> (i32, i32) {
    %c0_i32 = arith.constant 0 : i32
    %c0_i32_0 = arith.constant 0 : i32
    return %arg0, %c0_i32 : i32, i32
  }
  func.func @transform_1(%arg0: i32) -> (i32, i32) {
    %c0_i32 = arith.constant 0 : i32
    %c0_i32_0 = arith.constant 0 : i32
    return %arg0, %c0_i32 : i32, i32
  }
}

</mosaic_0001>

<llo_original>
// kernel: tpu_custom_call.1
$region0: #{tpu_custom_call.1}
  #allocation0 [shape = 'u32[]', space=smem, size = 0x4, offset = 0x4, fixed_abs, tag = 'smem constant byte address 0x4 - core index']
  #allocation1 [shape = 'u32[144,128]{1,0:T(1,128)}', space=vmem, size = 0x12000, scoped, tag = 'internal scratch']
  %s0 = inlined_call_operand.hbm [shape: f32[16,128], index: 0, kind: input, shape index: {}]
  %s1 = inlined_call_operand.hbm [shape: f32[16,128], index: 1, kind: output, shape index: {}]
  %s2 = sld [smem:[#allocation0]]
  $region18: #{tpu_custom_call.1} parent=0
    _
  %s4 = ssub.s32 1, %s2
  %s5 = scalar_select 0, %s4, %s2
  $region1: #{tpu_custom_call.1} parent=0
    #allocation2 [shape = 'u8[8192]{0}', space=vmem, size = 0x2000, scoped, tag = 'input window, operand 0, single buffered']
    #allocation3 [shape = 's32[1]{0}', space=sflag, size = 0x4, scoped, tag = 'scoped memory for tpu_custom_call.1']
    #allocation4 [shape = 's32[1]{0}', space=sflag, size = 0x4, scoped, tag = 'scoped memory for tpu_custom_call.1']
    #allocation5 [shape = 'u8[8192]{0}', space=vmem, size = 0x2000, scoped, tag = 'output window, operand 0, single buffered']
    %6 = vsyncpa [#allocation3], 0
    %7 = vsyncpa [#allocation4], 0
    // Predicated region
    $region2: #{tpu_custom_call.1} parent=1 // pred_check
      _
    $region3: #{tpu_custom_call.1} parent=1 // pred_check_branch
      %9 = sbr.rel (0) target = $region5
    $region4: #{tpu_custom_call.1} parent=1 // pred_region
      %s11 = ssub.s32 256, 256
      %12 = vsyncadd [#allocation3], %s11
      %s13 = sshll.u32 [#allocation2], 4
      %s14 = int_to_ptr.vmem [resolvable:$true] %s13
      %19 = dma.hbm_to_vmem [thread:$0]  %s0, 256, %s14, [#allocation3], 128, 128, 8
    $region5: #{tpu_custom_call.1} parent=1 // pred_fallthru
      _
    // Predicated region
    $region6: #{tpu_custom_call.1} parent=1 // pred_check
      _
    $region7: #{tpu_custom_call.1} parent=1 // pred_check_branch
      %21 = sbr.rel (0) target = $region9
    $region8: #{tpu_custom_call.1} parent=1 // pred_region
      %22 = dma.done [#allocation3], 256
    $region9: #{tpu_custom_call.1} parent=1 // pred_fallthru
      _
    %v23 = vld [vmem:[#allocation2] sm:$0xff]
    %v24 = vld [vmem:[#allocation2 + $0x8] sm:$0xff]
    %v25 = vsub.f32 %v23, 127.0
    %v26 = vsub.f32 %v24, 127.0
    %v27 = vmul.f32 %v25, 0.0078125
    %v28 = vmul.f32 %v26, 0.0078125
    %29 = vst [vmem:[#allocation5] sm:$0xff] %v27
    %30 = vst [vmem:[#allocation5 + $0x8] sm:$0xff] %v28
    // Predicated region
    $region10: #{tpu_custom_call.1} parent=1 // pred_check
      _
    $region11: #{tpu_custom_call.1} parent=1 // pred_check_branch
      %32 = sbr.rel (0) target = $region13
    $region12: #{tpu_custom_call.1} parent=1 // pred_region
      %s34 = ssub.s32 256, 256
      %35 = vsyncadd [#allocation4], %s34
      %s36 = sshll.u32 [#allocation5], 4
      %s37 = int_to_ptr.vmem [resolvable:$true] %s36
      %42 = dma.vmem_to_hbm [thread:$0]  %s37, 256, %s1, [#allocation4], 128, 128, 8
    $region13: #{tpu_custom_call.1} parent=1 // pred_fallthru
      _
    // Predicated region
    $region14: #{tpu_custom_call.1} parent=1 // pred_check
      _
    $region15: #{tpu_custom_call.1} parent=1 // pred_check_branch
      %44 = sbr.rel (0) target = $region17
    $region16: #{tpu_custom_call.1} parent=1 // pred_region
      %45 = dma.done [#allocation4], 256
    $region17: #{tpu_custom_call.1} parent=1 // pred_fallthru
      _
    %46 = vsyncpa [#allocation3], 1
    %47 = vsyncpa [#allocation4], 1

</llo_original>
